<compile_context>
chip_gen: v7x
topology: tpu7x:2x2x1
jax: 0.10.0
libtpu: 0.0.40
codegen_flags: <defaults>
</compile_context>

<pallas_src>
import jax
import jax.numpy as jnp
from jax import lax
from jax.experimental import pallas as pl
from jax.experimental.pallas import tpu as pltpu

LN_EPS = 1e-5  # F.layer_norm default eps


def parent_classifier_kernel(x_ref, wfc_ref, bfc_ref, wproj_ref, bproj_ref,
                             ln_ref, proj_ref):
    # fc: [bb, D] @ [D, P] on the MXU (bf16 operands, f32 accumulation) + f32 bias.
    y = jnp.dot(x_ref[...], wfc_ref[...],
                preferred_element_type=jnp.float32) + bfc_ref[...]

    # LayerNorm over the last dim, no affine params (F.layer_norm(x, (x.size(-1),))).
    # Single-pass statistics, kept in f32.
    inv_p = 1.0 / y.shape[-1]
    mean = jnp.sum(y, axis=-1, keepdims=True) * inv_p
    mean_sq = jnp.sum(y * y, axis=-1, keepdims=True) * inv_p
    var = jnp.maximum(mean_sq - mean * mean, 0.0)
    z = (y - mean) * lax.rsqrt(var + LN_EPS)
    ln_ref[...] = z.astype(ln_ref.dtype)

    # Dropout(p=0.2) in eval mode is identity.
    # TODO(synk): training-mode dropout (pltpu.prng_seed + pltpu.stateful_bernoulli).

    # proj: [bb, P] @ [P, E_pad] (bf16 operands, f32 accumulation) + f32 bias.
    # Columns >= proj_embed_dim are zero-padded so the store stays lane-dense.
    out = jnp.dot(z.astype(wproj_ref.dtype), wproj_ref[...],
                  preferred_element_type=jnp.float32) + bproj_ref[...]
    proj_ref[...] = out.astype(proj_ref.dtype)


def _round_up(n, m):
    return ((n + m - 1) // m) * m


def _pick_block_b(batch, row_align):
    # Largest batch tile (<=512, multiple of the sublane packing) that still gives
    # >=2 grid steps: enables double-buffering of x/outputs and both v7x TCs.
    for cand in (512, 256, 128, 64, 32, 16, 8):
        if cand % row_align == 0 and batch >= 2 * cand:
            return cand
    return min(512, _round_up(max(batch, row_align), row_align))


def parent_classifier(x, w_fc, b_fc, w_proj, b_proj, *, block_b=None,
                      mxu_dtype=jnp.bfloat16):
    """x: [B, input_dim]; w_fc: [num_parents, input_dim]; b_fc: [num_parents];
    w_proj: [proj_embed_dim, num_parents]; b_proj: [proj_embed_dim].
    Returns (layer_normed_logits [B, num_parents], projection [B, proj_embed_dim])."""
    B, D = x.shape
    P, Dw = w_fc.shape
    E, Pw = w_proj.shape
    assert Dw == D and Pw == P
    out_dtype = x.dtype

    itemsize = jnp.dtype(mxu_dtype).itemsize
    row_align = {4: 8, 2: 16, 1: 32}.get(itemsize, 8)

    if block_b is None:
        block_b = _pick_block_b(B, row_align)
    block_b = max(row_align, _round_up(block_b, row_align))
    block_b = min(block_b, _round_up(max(B, row_align), row_align))
    B_pad = _round_up(B, block_b)

    # Lane-dense proj output: pad the projection width to a multiple of 128 lanes.
    E_pad = _round_up(E, 128)

    # Host-side operand prep: pre-transpose weights and cast MXU operands to bf16
    # (halves weight DMA/VMEM, ~2x MXU throughput on v6e/v7x). Biases stay f32.
    xp = x if B_pad == B else jnp.pad(x, ((0, B_pad - B), (0, 0)))
    xp = xp.astype(mxu_dtype)
    wfc_t = w_fc.T.astype(mxu_dtype)                                         # [D, P]
    wproj_t = jnp.pad(w_proj.T, ((0, 0), (0, E_pad - E))).astype(mxu_dtype)  # [P, E_pad]
    bfc = b_fc.reshape(1, P).astype(jnp.float32)
    bproj = jnp.pad(b_proj.reshape(1, E), ((0, 0), (0, E_pad - E))).astype(jnp.float32)

    grid = (B_pad // block_b,)
    out_itemsize = jnp.dtype(out_dtype).itemsize

    # VMEM footprint: grid-invariant weights/biases (default double-buffered) plus
    # double-buffered x tile and output tiles. Sized explicitly so the scoped limit
    # is right on every generation (v7x has 64 MiB physical VMEM).
    footprint = (2 * (D * P + P * E_pad) * itemsize
                 + 2 * (P + E_pad) * 4
                 + 2 * block_b * D * itemsize
                 + 2 * block_b * (P + E_pad) * out_itemsize)
    vmem_limit = int(min(64 * 1024 * 1024, max(32 * 1024 * 1024, 4 * footprint)))

    # NOTE: the weight/bias index_maps are grid-invariant, so Pallas does not re-DMA
    # them across grid steps; single-buffering them (pl.Buffered(1)) only matters
    # once D*P / P*E grow large.
    # TODO(synk): if D*P weights stop fitting VMEM, add a K (input_dim) grid axis
    # marked "arbitrary" with an f32 VMEM accumulator instead of resident weights.
    ln_out, proj_out = pl.pallas_call(
        parent_classifier_kernel,
        out_shape=(
            jax.ShapeDtypeStruct((B_pad, P), out_dtype),
            jax.ShapeDtypeStruct((B_pad, E_pad), out_dtype),
        ),
        grid_spec=pltpu.PrefetchScalarGridSpec(
            num_scalar_prefetch=0,
            grid=grid,
            in_specs=[
                pl.BlockSpec((block_b, D), lambda i: (i, 0)),      # x tile
                pl.BlockSpec((D, P), lambda i: (0, 0)),            # W_fc^T (resident)
                pl.BlockSpec((1, P), lambda i: (0, 0)),            # b_fc
                pl.BlockSpec((P, E_pad), lambda i: (0, 0)),        # W_proj^T (resident)
                pl.BlockSpec((1, E_pad), lambda i: (0, 0)),        # b_proj
            ],
            out_specs=[
                pl.BlockSpec((block_b, P), lambda i: (i, 0)),      # layer-normed logits
                pl.BlockSpec((block_b, E_pad), lambda i: (i, 0)),  # projection (padded)
            ],
        ),
        compiler_params=pltpu.CompilerParams(
            dimension_semantics=("parallel",),
            vmem_limit_bytes=vmem_limit,
        ),
    )(xp, wfc_t, bfc, wproj_t, bproj)

    return ln_out[:B], proj_out[:B, :E]


def _trunc_normal(key, shape, std):
    # torch trunc_normal_: truncated to [-2*std, 2*std] (a=-2, b=2 in std units)
    return std * jax.random.truncated_normal(key, -2.0, 2.0, shape, jnp.float32)


def _reference(x, w_fc, b_fc, w_proj, b_proj, mxu_dtype=jnp.float32):
    # Reference with the same MXU-operand rounding as the kernel (f32 accumulation),
    # so the comparison only sees accumulation-order noise.
    f32 = jnp.float32
    xq = x.astype(mxu_dtype).astype(f32)
    wfcq = w_fc.astype(mxu_dtype).astype(f32)
    wprojq = w_proj.astype(mxu_dtype).astype(f32)
    y = xq @ wfcq.T + b_fc
    mean = jnp.mean(y, axis=-1, keepdims=True)
    var = jnp.mean((y - mean) ** 2, axis=-1, keepdims=True)
    z = (y - mean) / jnp.sqrt(var + LN_EPS)
    zq = z.astype(mxu_dtype).astype(f32)
    return z, zq @ wprojq.T + b_proj


if __name__ == "__main__":
    # Small forward-implied shapes; batch=256 so the grid has 2 pipelined steps.
    batch = 256
    input_dim = 32
    num_parents = 128
    proj_embed_dim = 64

    key = jax.random.PRNGKey(0)
    k_x, k_fc, k_proj = jax.random.split(key, 3)

    x = jax.random.normal(k_x, (batch, input_dim), jnp.float32)

    # Deterministic parameter init matching the module's __init__:
    # trunc_normal_(weight, std=2e-5), biases = 0.
    w_fc = _trunc_normal(k_fc, (num_parents, input_dim), 2e-5)
    b_fc = jnp.zeros((num_parents,), jnp.float32)
    w_proj = _trunc_normal(k_proj, (proj_embed_dim, num_parents), 2e-5)
    b_proj = jnp.zeros((proj_embed_dim,), jnp.float32)

    ln_out, proj_out = parent_classifier(x, w_fc, b_fc, w_proj, b_proj)
    jax.block_until_ready((ln_out, proj_out))

    ln_ref, proj_ref = _reference(x, w_fc, b_fc, w_proj, b_proj,
                                  mxu_dtype=jnp.bfloat16)
    assert ln_out.shape == (batch, num_parents)
    assert proj_out.shape == (batch, proj_embed_dim)
    assert jnp.allclose(ln_out, ln_ref, atol=1e-4, rtol=1e-3), \
        float(jnp.max(jnp.abs(ln_out - ln_ref)))
    assert jnp.allclose(proj_out, proj_ref, atol=1e-5, rtol=1e-3), \
        float(jnp.max(jnp.abs(proj_out - proj_ref)))

    print("KERNEL_OK")
</pallas_src>

<mosaic_0001>
module attributes {stable_mosaic.version = 11 : i64} {
  func.func @parent_classifier_kernel(%arg0: i32, %arg1: memref<128x32xbf16, #tpu.memory_space<vmem>>, %arg2: memref<32x128xbf16, #tpu.memory_space<vmem>>, %arg3: memref<1x128xf32, #tpu.memory_space<vmem>>, %arg4: memref<128x128xbf16, #tpu.memory_space<vmem>>, %arg5: memref<1x128xf32, #tpu.memory_space<vmem>>, %arg6: memref<128x128xf32, #tpu.memory_space<vmem>>, %arg7: memref<128x128xf32, #tpu.memory_space<vmem>>) attributes {dimension_semantics = [#tpu.dimension_semantics<parallel>], iteration_bounds = array<i64: 2>, scalar_prefetch = 0 : i64, scratch_operands = 0 : i64, tpu.core_type = #tpu.core_type<tc>, window_params = [{transform_indices = @transform_0, window_bounds = array<i64: 128, 32>}, {pipeline_mode = #tpu.pipeline_mode<synchronous>, transform_indices = @transform_1, window_bounds = array<i64: 32, 128>}, {pipeline_mode = #tpu.pipeline_mode<synchronous>, transform_indices = @transform_2, window_bounds = array<i64: 1, 128>}, {pipeline_mode = #tpu.pipeline_mode<synchronous>, transform_indices = @transform_3, window_bounds = array<i64: 128, 128>}, {pipeline_mode = #tpu.pipeline_mode<synchronous>, transform_indices = @transform_4, window_bounds = array<i64: 1, 128>}, {transform_indices = @transform_5, window_bounds = array<i64: 128, 128>}, {transform_indices = @transform_6, window_bounds = array<i64: 128, 128>}]} {
    %c0 = arith.constant 0 : index
    %c0_0 = arith.constant 0 : index
    %0 = vector.load %arg1[%c0, %c0_0] : memref<128x32xbf16, #tpu.memory_space<vmem>>, vector<128x32xbf16>
    %c0_1 = arith.constant 0 : index
    %c0_2 = arith.constant 0 : index
    %1 = vector.load %arg2[%c0_1, %c0_2] : memref<32x128xbf16, #tpu.memory_space<vmem>>, vector<32x128xbf16>
    %cst = arith.constant dense<0.000000e+00> : vector<128x128xf32>
    %2 = tpu.matmul %0, %1, %cst {dimension_numbers = #tpu.dot_dimension_numbers<[1], [0], [0], [1], [0, 0, 1, 1], [], []>} : vector<128x32xbf16>, vector<32x128xbf16>, vector<128x128xf32> -> vector<128x128xf32>
    %c0_3 = arith.constant 0 : index
    %c0_4 = arith.constant 0 : index
    %3 = vector.load %arg3[%c0_3, %c0_4] : memref<1x128xf32, #tpu.memory_space<vmem>>, vector<1x128xf32>
    %4 = vector.broadcast %3 : vector<1x128xf32> to vector<128x128xf32>
    %5 = arith.addf %2, %4 : vector<128x128xf32>
    %cst_5 = arith.constant dense<0.000000e+00> : vector<128xf32>
    %6 = vector.multi_reduction <add>, %5, %cst_5 [1] : vector<128x128xf32> to vector<128xf32>
    %7 = vector.shape_cast %6 : vector<128xf32> to vector<128x1xf32>
    %cst_6 = arith.constant 7.812500e-03 : f32
    %8 = vector.broadcast %cst_6 : f32 to vector<128x1xf32>
    %9 = arith.mulf %7, %8 : vector<128x1xf32>
    %10 = arith.mulf %5, %5 : vector<128x128xf32>
    %cst_7 = arith.constant dense<0.000000e+00> : vector<128xf32>
    %11 = vector.multi_reduction <add>, %10, %cst_7 [1] : vector<128x128xf32> to vector<128xf32>
    %12 = vector.shape_cast %11 : vector<128xf32> to vector<128x1xf32>
    %cst_8 = arith.constant 7.812500e-03 : f32
    %13 = vector.broadcast %cst_8 : f32 to vector<128x1xf32>
    %14 = arith.mulf %12, %13 : vector<128x1xf32>
    %15 = arith.mulf %9, %9 : vector<128x1xf32>
    %16 = arith.subf %14, %15 : vector<128x1xf32>
    %cst_9 = arith.constant 0.000000e+00 : f32
    %17 = vector.broadcast %cst_9 : f32 to vector<128x1xf32>
    %18 = arith.maximumf %16, %17 : vector<128x1xf32>
    %19 = vector.broadcast %9 : vector<128x1xf32> to vector<128x128xf32>
    %20 = arith.subf %5, %19 : vector<128x128xf32>
    %cst_10 = arith.constant 9.99999974E-6 : f32
    %21 = vector.broadcast %cst_10 : f32 to vector<128x1xf32>
    %22 = arith.addf %18, %21 : vector<128x1xf32>
    %23 = math.rsqrt %22 : vector<128x1xf32>
    %24 = vector.broadcast %23 : vector<128x1xf32> to vector<128x128xf32>
    %25 = arith.mulf %20, %24 : vector<128x128xf32>
    %c0_11 = arith.constant 0 : index
    %c0_12 = arith.constant 0 : index
    %26 = vector.load %arg6[%c0_11, %c0_12] : memref<128x128xf32, #tpu.memory_space<vmem>>, vector<128x128xf32>
    tpu.vector_store %arg6[%c0_11, %c0_12], %25 {strides = array<i32>} : memref<128x128xf32, #tpu.memory_space<vmem>>, vector<128x128xf32>,
    %27 = arith.truncf %25 : vector<128x128xf32> to vector<128x128xbf16>
    %c0_13 = arith.constant 0 : index
    %c0_14 = arith.constant 0 : index
    %28 = vector.load %arg4[%c0_13, %c0_14] : memref<128x128xbf16, #tpu.memory_space<vmem>>, vector<128x128xbf16>
    %cst_15 = arith.constant dense<0.000000e+00> : vector<128x128xf32>
    %29 = tpu.matmul %27, %28, %cst_15 {dimension_numbers = #tpu.dot_dimension_numbers<[1], [0], [0], [1], [0, 0, 1, 1], [], []>} : vector<128x128xbf16>, vector<128x128xbf16>, vector<128x128xf32> -> vector<128x128xf32>
    %c0_16 = arith.constant 0 : index
    %c0_17 = arith.constant 0 : index
    %30 = vector.load %arg5[%c0_16, %c0_17] : memref<1x128xf32, #tpu.memory_space<vmem>>, vector<1x128xf32>
    %31 = vector.broadcast %30 : vector<1x128xf32> to vector<128x128xf32>
    %32 = arith.addf %29, %31 : vector<128x128xf32>
    %c0_18 = arith.constant 0 : index
    %c0_19 = arith.constant 0 : index
    %33 = vector.load %arg7[%c0_18, %c0_19] : memref<128x128xf32, #tpu.memory_space<vmem>>, vector<128x128xf32>
    tpu.vector_store %arg7[%c0_18, %c0_19], %32 {strides = array<i32>} : memref<128x128xf32, #tpu.memory_space<vmem>>, vector<128x128xf32>,
    return
  }
  func.func @transform_0(%arg0: i32) -> (i32, i32) {
    %c0_i32 = arith.constant 0 : i32
    %c0_i32_0 = arith.constant 0 : i32
    return %arg0, %c0_i32 : i32, i32
  }
  func.func @transform_1(%arg0: i32) -> (i32, i32) {
    %c0_i32 = arith.constant 0 : i32
    %c0_i32_0 = arith.constant 0 : i32
    %c0_i32_1 = arith.constant 0 : i32
    return %c0_i32, %c0_i32_0 : i32, i32
  }
  func.func @transform_2(%arg0: i32) -> (i32, i32) {
    %c0_i32 = arith.constant 0 : i32
    %c0_i32_0 = arith.constant 0 : i32
    %c0_i32_1 = arith.constant 0 : i32
    return %c0_i32, %c0_i32_0 : i32, i32
  }
  func.func @transform_3(%arg0: i32) -> (i32, i32) {
    %c0_i32 = arith.constant 0 : i32
    %c0_i32_0 = arith.constant 0 : i32
    %c0_i32_1 = arith.constant 0 : i32
    return %c0_i32, %c0_i32_0 : i32, i32
  }
  func.func @transform_4(%arg0: i32) -> (i32, i32) {
    %c0_i32 = arith.constant 0 : i32
    %c0_i32_0 = arith.constant 0 : i32
    %c0_i32_1 = arith.constant 0 : i32
    return %c0_i32, %c0_i32_0 : i32, i32
  }
  func.func @transform_5(%arg0: i32) -> (i32, i32) {
    %c0_i32 = arith.constant 0 : i32
    %c0_i32_0 = arith.constant 0 : i32
    return %arg0, %c0_i32 : i32, i32
  }
  func.func @transform_6(%arg0: i32) -> (i32, i32) {
    %c0_i32 = arith.constant 0 : i32
    %c0_i32_0 = arith.constant 0 : i32
    return %arg0, %c0_i32 : i32, i32
  }
}

</mosaic_0001>

<llo_original>
// kernel: tpu_custom_call.1
$region0: #{tpu_custom_call.1}
  #allocation0 [shape = 'u32[]', space=smem, size = 0x4, offset = 0x4, fixed_abs, tag = 'smem constant byte address 0x4 - core index']
  #allocation1 [shape = 'u32[144,128]{1,0:T(1,128)}', space=vmem, size = 0x12000, scoped, tag = 'internal scratch']
  %s0 = inlined_call_operand.vmem [shape: bf16[256,32], index: 0, kind: input, shape index: {}]
  %s1 = inlined_call_operand.vmem [shape: bf16[32,128], index: 1, kind: input, shape index: {}]
  %s2 = inlined_call_operand.vmem [shape: f32[1,128], index: 2, kind: input, shape index: {}]
  %s3 = inlined_call_operand.vmem [shape: bf16[128,128], index: 3, kind: input, shape index: {}]
  %s4 = inlined_call_operand.vmem [shape: f32[1,128], index: 4, kind: input, shape index: {}]
  %s5 = inlined_call_operand.hbm [shape: f32[256,128], index: 5, kind: output, shape index: {0}]
  %s6 = inlined_call_operand.hbm [shape: f32[256,128], index: 6, kind: output, shape index: {1}]
  %7 = xla_tuple %s5, %s6
  %s8 = sld [smem:[#allocation0]]
  $region61: #{tpu_custom_call.1} parent=0
    _
  %s10 = ssub.s32 1, %s8
  %s11 = scalar_select 0, %s10, %s8
  $region1: #{tpu_custom_call.1} parent=0
    #allocation2 [shape = 'u8[131072]{0}', space=vmem, size = 0x20000, scoped, tag = 'output window, operand 0']
    #allocation3 [shape = 's32[2]{0}', space=sflag, size = 0x8, scoped, tag = 'scoped memory for tpu_custom_call.1']
    #allocation4 [shape = 'u8[131072]{0}', space=vmem, size = 0x20000, scoped, tag = 'output window, operand 1']
    #allocation5 [shape = 's32[2]{0}', space=sflag, size = 0x8, scoped, tag = 'scoped memory for tpu_custom_call.1']
    %12 = vsyncpa [#allocation3], 0
    %s13 = scalar_lea.sflag [#allocation3], 1
    %14 = vsyncpa %s13, 0
    %15 = vsyncpa [#allocation5], 0
    %s16 = scalar_lea.sflag [#allocation5], 1
    %17 = vsyncpa %s16, 0
    loop: start=0, step=1, limit=4
    $region2: #{tpu_custom_call.1} parent=1 // loop_pre_header
      _
    $region3: #{tpu_custom_call.1} parent=1 // loop_header
      %s19 = sphi 0, %s23
      %p20 = scmp.ge.s32.totalorder %s19, 4
      %s29 = sphi 0, %s31
      %s32 = sphi 0, %s29
      %s33 = sphi 0, %s32
      %s49 = sphi 0, %s33
      %s53 = sphi 0, %s53
      %s55 = sphi 0, %s53
      %s56 = sphi 0, %s55
      %s70 = sphi 0, %s56
      %s74 = sphi 0, %s74
      %s76 = sphi 0, %s74
      %s77 = sphi 0, %s76
      %s91 = sphi 0, %s77
      %s95 = sphi 0, %s95
      %s97 = sphi 0, %s95
      %s98 = sphi 0, %s97
      %s112 = sphi 0, %s98
      %s116 = sphi 0, %s116
      %s118 = sphi 0, %s116
      %s119 = sphi 0, %s118
      %s133 = sphi 0, %s119
      %s139 = sphi 0, %s141
      %s142 = sphi 0, %s139
      %s143 = sphi 0, %s142
      %s159 = sphi 0, %s143
      %s165 = sphi 0, %s167
      %s168 = sphi 0, %s165
      %s169 = sphi 0, %s168
      %s185 = sphi 0, %s169
    $region4: #{tpu_custom_call.1} parent=1 // loop_header_branch
      %22 = sbr.rel (%p20) target = $region8
    $region5: #{tpu_custom_call.1} parent=1 // loop_body
      %s24 = ssub.s32 %s19, 1
      %s25 = ssub.s32 %s19, 2
      %s26 = sadd.s32 %s19, 1
      %s27 = ssub.s32 %s19, %s26
      %p28 = scmp.eq.s32.totalorder %s27, 0
      %s30 = sadd.s32 %s29, 1
      %s31 = scalar_select %p28, %s29, %s30
      %p34 = pneg %p28
      %p35 = scmp.eq.s32.totalorder %s19, 1
      %p36 = por %p34, %p35
      %p37 = scmp.ne.s32.totalorder %s29, %s32
      %p38 = scmp.eq.s32.totalorder %s19, 0
      %p39 = por %p37, %p38
      %p40 = scmp.ne.s32.totalorder %s29, %s32
      %p41 = scmp.eq.s32.totalorder %s24, 1
      %p42 = por %p40, %p41
      %p43 = scmp.ne.s32.totalorder %s32, %s33
      %p44 = scmp.eq.s32.totalorder %s24, 0
      %p45 = por %p43, %p44
      %p46 = scmp.ne.s32.totalorder %s32, %s33
      %p47 = scmp.eq.s32.totalorder %s25, 1
      %p48 = por %p46, %p47
      %p50 = scmp.ne.s32.totalorder %s33, %s49
      %p51 = scmp.eq.s32.totalorder %s25, 0
      %p52 = por %p50, %p51
      %s54 = sadd.s32 %s53, 1
      %p57 = scmp.eq.s32.totalorder %s19, 1
      %p58 = scmp.ne.s32.totalorder %s53, %s55
      %p59 = scmp.eq.s32.totalorder %s19, 0
      %p60 = por %p58, %p59
      %p61 = scmp.ne.s32.totalorder %s53, %s55
      %p62 = scmp.eq.s32.totalorder %s24, 1
      %p63 = por %p61, %p62
      %p64 = scmp.ne.s32.totalorder %s55, %s56
      %p65 = scmp.eq.s32.totalorder %s24, 0
      %p66 = por %p64, %p65
      %p67 = scmp.ne.s32.totalorder %s55, %s56
      %p68 = scmp.eq.s32.totalorder %s25, 1
      %p69 = por %p67, %p68
      %p71 = scmp.ne.s32.totalorder %s56, %s70
      %p72 = scmp.eq.s32.totalorder %s25, 0
      %p73 = por %p71, %p72
      %s75 = sadd.s32 %s74, 1
      %p78 = scmp.eq.s32.totalorder %s19, 1
      %p79 = scmp.ne.s32.totalorder %s74, %s76
      %p80 = scmp.eq.s32.totalorder %s19, 0
      %p81 = por %p79, %p80
      %p82 = scmp.ne.s32.totalorder %s74, %s76
      %p83 = scmp.eq.s32.totalorder %s24, 1
      %p84 = por %p82, %p83
      %p85 = scmp.ne.s32.totalorder %s76, %s77
      %p86 = scmp.eq.s32.totalorder %s24, 0
      %p87 = por %p85, %p86
      %p88 = scmp.ne.s32.totalorder %s76, %s77
      %p89 = scmp.eq.s32.totalorder %s25, 1
      %p90 = por %p88, %p89
      %p92 = scmp.ne.s32.totalorder %s77, %s91
      %p93 = scmp.eq.s32.totalorder %s25, 0
      %p94 = por %p92, %p93
      %s96 = sadd.s32 %s95, 1
      %p99 = scmp.eq.s32.totalorder %s19, 1
      %p100 = scmp.ne.s32.totalorder %s95, %s97
      %p101 = scmp.eq.s32.totalorder %s19, 0
      %p102 = por %p100, %p101
      %p103 = scmp.ne.s32.totalorder %s95, %s97
      %p104 = scmp.eq.s32.totalorder %s24, 1
      %p105 = por %p103, %p104
      %p106 = scmp.ne.s32.totalorder %s97, %s98
      %p107 = scmp.eq.s32.totalorder %s24, 0
      %p108 = por %p106, %p107
      %p109 = scmp.ne.s32.totalorder %s97, %s98
      %p110 = scmp.eq.s32.totalorder %s25, 1
      %p111 = por %p109, %p110
      %p113 = scmp.ne.s32.totalorder %s98, %s112
      %p114 = scmp.eq.s32.totalorder %s25, 0
      %p115 = por %p113, %p114
      %s117 = sadd.s32 %s116, 1
      %p120 = scmp.eq.s32.totalorder %s19, 1
      %p121 = scmp.ne.s32.totalorder %s116, %s118
      %p122 = scmp.eq.s32.totalorder %s19, 0
      %p123 = por %p121, %p122
      %p124 = scmp.ne.s32.totalorder %s116, %s118
      %p125 = scmp.eq.s32.totalorder %s24, 1
      %p126 = por %p124, %p125
      %p127 = scmp.ne.s32.totalorder %s118, %s119
      %p128 = scmp.eq.s32.totalorder %s24, 0
      %p129 = por %p127, %p128
      %p130 = scmp.ne.s32.totalorder %s118, %s119
      %p131 = scmp.eq.s32.totalorder %s25, 1
      %p132 = por %p130, %p131
      %p134 = scmp.ne.s32.totalorder %s119, %s133
      %p135 = scmp.eq.s32.totalorder %s25, 0
      %p136 = por %p134, %p135
      %s137 = ssub.s32 %s19, %s26
      %p138 = scmp.eq.s32.totalorder %s137, 0
      %s140 = sadd.s32 %s139, 1
      %s141 = scalar_select %p138, %s139, %s140
      %p144 = pneg %p138
      %p145 = scmp.eq.s32.totalorder %s19, 1
      %p146 = por %p144, %p145
      %p147 = scmp.ne.s32.totalorder %s139, %s142
      %p148 = scmp.eq.s32.totalorder %s19, 0
      %p149 = por %p147, %p148
      %p150 = scmp.ne.s32.totalorder %s139, %s142
      %p151 = scmp.eq.s32.totalorder %s24, 1
      %p152 = por %p150, %p151
      %p153 = scmp.ne.s32.totalorder %s142, %s143
      %p154 = scmp.eq.s32.totalorder %s24, 0
      %p155 = por %p153, %p154
      %p156 = scmp.ne.s32.totalorder %s142, %s143
      %p157 = scmp.eq.s32.totalorder %s25, 1
      %p158 = por %p156, %p157
      %p160 = scmp.ne.s32.totalorder %s143, %s159
      %p161 = scmp.eq.s32.totalorder %s25, 0
      %p162 = por %p160, %p161
      %s163 = ssub.s32 %s19, %s26
      %p164 = scmp.eq.s32.totalorder %s163, 0
      %s166 = sadd.s32 %s165, 1
      %s167 = scalar_select %p164, %s165, %s166
      %p170 = pneg %p164
      %p171 = scmp.eq.s32.totalorder %s19, 1
      %p172 = por %p170, %p171
      %p173 = scmp.ne.s32.totalorder %s165, %s168
      %p174 = scmp.eq.s32.totalorder %s19, 0
      %p175 = por %p173, %p174
      %p176 = scmp.ne.s32.totalorder %s165, %s168
      %p177 = scmp.eq.s32.totalorder %s24, 1
      %p178 = por %p176, %p177
      %p179 = scmp.ne.s32.totalorder %s168, %s169
      %p180 = scmp.eq.s32.totalorder %s24, 0
      %p181 = por %p179, %p180
      %p182 = scmp.ne.s32.totalorder %s168, %s169
      %p183 = scmp.eq.s32.totalorder %s25, 1
      %p184 = por %p182, %p183
      %p186 = scmp.ne.s32.totalorder %s169, %s185
      %p187 = scmp.eq.s32.totalorder %s25, 0
      %p188 = por %p186, %p187
      %p189 = scmp.le.s32.totalorder 1, %s19
      %p190 = scmp.lt.s32.totalorder %s19, 3
      %p191 = pnand %p189, %p190
      %p192 = pneg %p191
      // Predicated region
      $region9: #{tpu_custom_call.1} parent=5 // pred_check
        _
      $region10: #{tpu_custom_call.1} parent=5 // pred_check_branch
        %194 = sbr.rel (%p191) target = $region12
      $region11: #{tpu_custom_call.1} parent=5 // pred_region
        %s195 = ssub.s32 %s19, 1
        // Predicated region
        $region13: #{tpu_custom_call.1} parent=11 // pred_check
          %p196 = pneg %p66
        $region14: #{tpu_custom_call.1} parent=11 // pred_check_branch
          %198 = sbr.rel (%p196) target = $region16
        $region15: #{tpu_custom_call.1} parent=11 // pred_region
          _
        $region16: #{tpu_custom_call.1} parent=11 // pred_fallthru
          _
        // Predicated region
        $region17: #{tpu_custom_call.1} parent=11 // pred_check
          %p199 = pneg %p87
        $region18: #{tpu_custom_call.1} parent=11 // pred_check_branch
          %201 = sbr.rel (%p199) target = $region20
        $region19: #{tpu_custom_call.1} parent=11 // pred_region
          _
        $region20: #{tpu_custom_call.1} parent=11 // pred_fallthru
          _
        // Predicated region
        $region21: #{tpu_custom_call.1} parent=11 // pred_check
          %p202 = pneg %p108
        $region22: #{tpu_custom_call.1} parent=11 // pred_check_branch
          %204 = sbr.rel (%p202) target = $region24
        $region23: #{tpu_custom_call.1} parent=11 // pred_region
          _
        $region24: #{tpu_custom_call.1} parent=11 // pred_fallthru
          _
        // Predicated region
        $region25: #{tpu_custom_call.1} parent=11 // pred_check
          %p205 = pneg %p129
        $region26: #{tpu_custom_call.1} parent=11 // pred_check_branch
          %207 = sbr.rel (%p205) target = $region28
        $region27: #{tpu_custom_call.1} parent=11 // pred_region
          _
        $region28: #{tpu_custom_call.1} parent=11 // pred_fallthru
          _
      $region12: #{tpu_custom_call.1} parent=5 // pred_fallthru
        _
      %p208 = scmp.lt.s32.totalorder %s19, 2
      // Predicated region
      $region29: #{tpu_custom_call.1} parent=5 // pred_check
        %p209 = pneg %p208
      $region30: #{tpu_custom_call.1} parent=5 // pred_check_branch
        %211 = sbr.rel (%p209) target = $region32
      $region31: #{tpu_custom_call.1} parent=5 // pred_region
        // Predicated region
        $region33: #{tpu_custom_call.1} parent=31 // pred_check
          %p212 = pneg %p39
        $region34: #{tpu_custom_call.1} parent=31 // pred_check_branch
          %214 = sbr.rel (%p212) target = $region36
        $region35: #{tpu_custom_call.1} parent=31 // pred_region
          %s215 = smul.u32 16, %s19
          %p216 = scmp.lt.s32.totalorder %s215, 31
          %s217 = scalar_select %p216, %s215, 31
          %s218 = smul.addr %s217, 4
          %s219 = scalar_lea.vmem %s0, %s218
          %s220 = smul.u32 16, %s19
        $region36: #{tpu_custom_call.1} parent=31 // pred_fallthru
          _
      $region32: #{tpu_custom_call.1} parent=5 // pred_fallthru
        _
      %p221 = scmp.le.s32.totalorder 1, %s19
      %p222 = scmp.lt.s32.totalorder %s19, 3
      %p223 = pnand %p221, %p222
      %p224 = pneg %p223
      // Predicated region
      $region37: #{tpu_custom_call.1} parent=5 // pred_check
        _
      $region38: #{tpu_custom_call.1} parent=5 // pred_check_branch
        %226 = sbr.rel (%p223) target = $region40
      $region39: #{tpu_custom_call.1} parent=5 // pred_region
        %s227 = ssub.s32 %s19, 1
        %s228 = smul.u32 16, %s24
        %p229 = scmp.lt.s32.totalorder %s228, 31
        %s230 = scalar_select %p229, %s228, 31
        %s231 = smul.addr %s230, 4
        %s232 = scalar_lea.vmem %s0, %s231
        %p233 = pneg %p45
        %p234 = pneg %p42
        %p235 = pneg %p66
        %p236 = pneg %p63
        %p237 = pneg %p87
        %p238 = pneg %p84
        %p239 = pneg %p108
        %p240 = pneg %p105
        %p241 = pneg %p129
        %p242 = pneg %p126
        %p243 = pneg %p155
        %p244 = pneg %p152
        %s245 = sand.u32 %s142, 1
        %s246 = scalar_lea.sflag [#allocation3], %s245
        %s247 = sand.u32 %s142, 1
        %s248 = smul.addr %s247, 128
        %s249 = scalar_lea.vmem [#allocation2], %s248
        %p250 = pneg %p181
        %p251 = pneg %p178
        %s252 = sand.u32 %s168, 1
        %s253 = scalar_lea.sflag [#allocation5], %s252
        %s254 = sand.u32 %s168, 1
        %s255 = smul.addr %s254, 128
        %s256 = scalar_lea.vmem [#allocation4], %s255
        %s257 = smul.u32 16, %s24
        %p258 = scmp.lt.s32.totalorder %s257, 31
        %s259 = scalar_select %p258, %s257, 31
        %s260 = smul.addr %s259, 4
        %s261 = scalar_lea.vmem %s0, %s260
        %s262 = smul.u32 16, %s24
        %s263 = smul.u32 16, %s24
        %s264 = smul.u32 16, %s24
        %v266 = vld [vmem:[%s261] sm:$0xf]
        %v267 = vld [vmem:[%s261 + $0x4] sm:$0xf]
        %v268 = vld [vmem:[%s261 + $0x8] sm:$0xf]
        %v269 = vld [vmem:[%s261 + $0xc] sm:$0xf]
        %v270 = vld [vmem:[%s261 + $0x10] sm:$0xf]
        %v271 = vld [vmem:[%s261 + $0x14] sm:$0xf]
        %v272 = vld [vmem:[%s261 + $0x18] sm:$0xf]
        %v273 = vld [vmem:[%s261 + $0x1c] sm:$0xf]
        %v274 = vld [vmem:[%s261 + $0x20] sm:$0xf]
        %v275 = vld [vmem:[%s261 + $0x24] sm:$0xf]
        %v276 = vld [vmem:[%s261 + $0x28] sm:$0xf]
        %v277 = vld [vmem:[%s261 + $0x2c] sm:$0xf]
        %v278 = vld [vmem:[%s261 + $0x30] sm:$0xf]
        %v279 = vld [vmem:[%s261 + $0x34] sm:$0xf]
        %v280 = vld [vmem:[%s261 + $0x38] sm:$0xf]
        %v281 = vld [vmem:[%s261 + $0x3c] sm:$0xf]
        %v282 = vld [vmem:[%s1] sm:$0xf]
        %v283 = vld [vmem:[%s1 + $0x4] sm:$0xf]
        %v284 = vld [vmem:[%s1 + $0x8] sm:$0xf]
        %v285 = vld [vmem:[%s1 + $0xc] sm:$0xf]
        %v286 = vld [vmem:[%s2] sm:$0x1]
        %v288 = vlaneseq
        %v289 = vshrl.u32 %v288, 7
        %v290 = vsub.s32 0, %v289
        %v291 = vrot.slane %v286, %v290
        %v309 = vunpack.c.l.b16 %v266
        %v310 = vunpack.c.l.b16 %v267
        %v311 = vunpack.c.l.b16 %v268
        %v312 = vunpack.c.l.b16 %v269
        %v313 = vunpack.c.l.b16 %v270
        %v314 = vunpack.c.l.b16 %v271
        %v315 = vunpack.c.l.b16 %v272
        %v316 = vunpack.c.l.b16 %v273
        %v317 = vunpack.c.l.b16 %v274
        %v318 = vunpack.c.l.b16 %v275
        %v319 = vunpack.c.l.b16 %v276
        %v320 = vunpack.c.l.b16 %v277
        %v321 = vunpack.c.l.b16 %v278
        %v322 = vunpack.c.l.b16 %v279
        %v323 = vunpack.c.l.b16 %v280
        %v324 = vunpack.c.l.b16 %v281
        %v325 = vpack.c.b16 %v310, %v309
        %v326 = vpack.c.b16 %v312, %v311
        %v327 = vpack.c.b16 %v314, %v313
        %v328 = vpack.c.b16 %v316, %v315
        %v329 = vpack.c.b16 %v318, %v317
        %v330 = vpack.c.b16 %v320, %v319
        %v331 = vpack.c.b16 %v322, %v321
        %v332 = vpack.c.b16 %v324, %v323
        %v337 = vunpack.c.l.b16 %v282
        %v338 = vunpack.c.l.b16 %v283
        %v339 = vunpack.c.l.b16 %v284
        %v340 = vunpack.c.l.b16 %v285
        %v341 = vpack.c.b16 %v338, %v337
        %v342 = vpack.c.b16 %v340, %v339
        %vm345 = vcmask 261120
        %v347 = vsel %vm345, %v325, 0
        %v350 = vsel %vm345, %v326, 0
        %v353 = vsel %vm345, %v327, 0
        %v356 = vsel %vm345, %v328, 0
        %v359 = vsel %vm345, %v329, 0
        %v362 = vsel %vm345, %v330, 0
        %v365 = vsel %vm345, %v331, 0
        %v368 = vsel %vm345, %v332, 0
        %370 = vmatprep.subr.bf16.mxu0 0
        %371 = vmatpush1.bf16.msra.mxu0 %v341
        %372 = vmatprep.subr.bf16.mxu0 0
        %373 = vmatpush1.bf16.msra.mxu0 %v342
        %374 = vmatprep.subr.bf16.mxu0 0
        %375 = vmatpush1.bf16.msra.mxu0 0
        %376 = vmatprep.subr.bf16.mxu0 0
        %377 = vmatpush1.bf16.msra.mxu0 0
        %378 = vmatprep.subr.bf16.mxu0 0
        %379 = vmatpush1.bf16.msra.mxu0 0
        %380 = vmatprep.subr.bf16.mxu0 0
        %381 = vmatpush1.bf16.msra.mxu0 0
        %382 = vmatprep.subr.bf16.mxu0 0
        %383 = vmatpush1.bf16.msra.mxu0 0
        %384 = vmatprep.subr.bf16.mxu0 0
        %385 = vmatpush1.bf16.msra.mxu0 0
        %386 = vmatprep.subr.bf16.mxu0 0
        %387 = vmatpush1.bf16.msra.mxu0 0
        %388 = vmatprep.subr.bf16.mxu0 0
        %389 = vmatpush1.bf16.msra.mxu0 0
        %390 = vmatprep.subr.bf16.mxu0 0
        %391 = vmatpush1.bf16.msra.mxu0 0
        %392 = vmatprep.subr.bf16.mxu0 0
        %393 = vmatpush1.bf16.msra.mxu0 0
        %394 = vmatprep.subr.bf16.mxu0 0
        %395 = vmatpush1.bf16.msra.mxu0 0
        %396 = vmatprep.subr.bf16.mxu0 0
        %397 = vmatpush1.bf16.msra.mxu0 0
        %398 = vmatprep.subr.bf16.mxu0 0
        %399 = vmatpush1.bf16.msra.mxu0 0
        %400 = vmatprep.subr.bf16.mxu0 0
        %401 = vmatpush1.bf16.msra.mxu0 0
        %402 = vmatprep.mubr.bf16.mxu0 0
        %403 = vmatmul.mubr.bf16.gmra.mrb[0].mxu0 %v347
        %v404 = vpop.f32.mrb[0].mxu0
        %v405 = vadd.f32 %v291, %v404
        %v406 = vpop.f32.mrb[0].mxu0
        %v407 = vpop.f32.mrb[0].mxu0
        %v408 = vadd.f32 %v291, %v407
        %v409 = vpop.f32.mrb[0].mxu0
        %410 = vmatprep.mubr.bf16.mxu0 0
        %411 = vmatmul.mubr.bf16.gmra.mrb[0].mxu0 %v350
        %v412 = vpop.f32.mrb[0].mxu0
        %v413 = vadd.f32 %v291, %v412
        %v414 = vpop.f32.mrb[0].mxu0
        %v415 = vpop.f32.mrb[0].mxu0
        %v416 = vadd.f32 %v291, %v415
        %v417 = vpop.f32.mrb[0].mxu0
        %418 = vmatprep.mubr.bf16.mxu0 0
        %419 = vmatmul.mubr.bf16.gmra.mrb[0].mxu0 %v353
        %v420 = vpop.f32.mrb[0].mxu0
        %v421 = vadd.f32 %v291, %v420
        %v422 = vpop.f32.mrb[0].mxu0
        %v423 = vpop.f32.mrb[0].mxu0
        %v424 = vadd.f32 %v291, %v423
        %v425 = vpop.f32.mrb[0].mxu0
        %426 = vmatprep.mubr.bf16.mxu0 0
        %427 = vmatmul.mubr.bf16.gmra.mrb[0].mxu0 %v356
        %v428 = vpop.f32.mrb[0].mxu0
        %v429 = vadd.f32 %v291, %v428
        %v430 = vpop.f32.mrb[0].mxu0
        %v431 = vpop.f32.mrb[0].mxu0
        %v432 = vadd.f32 %v291, %v431
        %v433 = vpop.f32.mrb[0].mxu0
        %434 = vmatprep.mubr.bf16.mxu0 0
        %435 = vmatmul.mubr.bf16.gmra.mrb[0].mxu0 %v359
        %v436 = vpop.f32.mrb[0].mxu0
        %v437 = vadd.f32 %v291, %v436
        %v438 = vpop.f32.mrb[0].mxu0
        %v439 = vpop.f32.mrb[0].mxu0
        %v440 = vadd.f32 %v291, %v439
        %v441 = vpop.f32.mrb[0].mxu0
        %442 = vmatprep.mubr.bf16.mxu0 0
        %443 = vmatmul.mubr.bf16.gmra.mrb[0].mxu0 %v362
        %v444 = vpop.f32.mrb[0].mxu0
        %v445 = vadd.f32 %v291, %v444
        %v446 = vpop.f32.mrb[0].mxu0
        %v447 = vpop.f32.mrb[0].mxu0
        %v448 = vadd.f32 %v291, %v447
        %v449 = vpop.f32.mrb[0].mxu0
        %450 = vmatprep.mubr.bf16.mxu0 0
        %451 = vmatmul.mubr.bf16.gmra.mrb[0].mxu0 %v365
        %v452 = vpop.f32.mrb[0].mxu0
        %v453 = vadd.f32 %v291, %v452
        %v454 = vpop.f32.mrb[0].mxu0
        %v455 = vpop.f32.mrb[0].mxu0
        %v456 = vadd.f32 %v291, %v455
        %v457 = vpop.f32.mrb[0].mxu0
        %458 = vmatprep.mubr.bf16.mxu0 0
        %459 = vmatmul.mubr.bf16.gmra.mrb[0].mxu0 %v368
        %v460 = vpop.f32.mrb[0].mxu0
        %v461 = vadd.f32 %v291, %v460
        %v462 = vpop.f32.mrb[0].mxu0
        %v463 = vpop.f32.mrb[0].mxu0
        %v464 = vadd.f32 %v291, %v463
        %v465 = vpop.f32.mrb[0].mxu0
        %466 = vdwg.mxu0
        %467 = vadd.xlane.f32.xlu0 %v405
        %v468 = vpop.xlane.xlu0 %467
        %469 = vadd.xlane.f32.xlu0 %v408
        %v470 = vpop.xlane.xlu0 %469
        %471 = vadd.xlane.f32.xlu0 %v413
        %v472 = vpop.xlane.xlu0 %471
        %473 = vadd.xlane.f32.xlu0 %v416
        %v474 = vpop.xlane.xlu0 %473
        %475 = vadd.xlane.f32.xlu0 %v421
        %v476 = vpop.xlane.xlu0 %475
        %477 = vadd.xlane.f32.xlu0 %v424
        %v478 = vpop.xlane.xlu0 %477
        %479 = vadd.xlane.f32.xlu0 %v429
        %v480 = vpop.xlane.xlu0 %479
        %481 = vadd.xlane.f32.xlu0 %v432
        %v482 = vpop.xlane.xlu0 %481
        %483 = vadd.xlane.f32.xlu0 %v437
        %v484 = vpop.xlane.xlu0 %483
        %485 = vadd.xlane.f32.xlu0 %v440
        %v486 = vpop.xlane.xlu0 %485
        %487 = vadd.xlane.f32.xlu0 %v445
        %v488 = vpop.xlane.xlu0 %487
        %489 = vadd.xlane.f32.xlu0 %v448
        %v490 = vpop.xlane.xlu0 %489
        %491 = vadd.xlane.f32.xlu0 %v453
        %v492 = vpop.xlane.xlu0 %491
        %493 = vadd.xlane.f32.xlu0 %v456
        %v494 = vpop.xlane.xlu0 %493
        %495 = vadd.xlane.f32.xlu0 %v461
        %v496 = vpop.xlane.xlu0 %495
        %497 = vadd.xlane.f32.xlu0 %v464
        %v498 = vpop.xlane.xlu0 %497
        %v499 = vmul.f32 %v468, 0.0078125
        %v500 = vmul.f32 %v470, 0.0078125
        %v501 = vmul.f32 %v472, 0.0078125
        %v502 = vmul.f32 %v474, 0.0078125
        %v503 = vmul.f32 %v476, 0.0078125
        %v504 = vmul.f32 %v478, 0.0078125
        %v505 = vmul.f32 %v480, 0.0078125
        %v506 = vmul.f32 %v482, 0.0078125
        %v507 = vmul.f32 %v484, 0.0078125
        %v508 = vmul.f32 %v486, 0.0078125
        %v509 = vmul.f32 %v488, 0.0078125
        %v510 = vmul.f32 %v490, 0.0078125
        %v511 = vmul.f32 %v492, 0.0078125
        %v512 = vmul.f32 %v494, 0.0078125
        %v513 = vmul.f32 %v496, 0.0078125
        %v514 = vmul.f32 %v498, 0.0078125
        %v515 = vmul.f32 %v405, %v405
        %v516 = vmul.f32 %v408, %v408
        %v517 = vmul.f32 %v413, %v413
        %v518 = vmul.f32 %v416, %v416
        %v519 = vmul.f32 %v421, %v421
        %v520 = vmul.f32 %v424, %v424
        %v521 = vmul.f32 %v429, %v429
        %v522 = vmul.f32 %v432, %v432
        %v523 = vmul.f32 %v437, %v437
        %v524 = vmul.f32 %v440, %v440
        %v525 = vmul.f32 %v445, %v445
        %v526 = vmul.f32 %v448, %v448
        %v527 = vmul.f32 %v453, %v453
        %v528 = vmul.f32 %v456, %v456
        %v529 = vmul.f32 %v461, %v461
        %v530 = vmul.f32 %v464, %v464
        %531 = vadd.xlane.f32.xlu0 %v515
        %v532 = vpop.xlane.xlu0 %531
        %533 = vadd.xlane.f32.xlu0 %v516
        %v534 = vpop.xlane.xlu0 %533
        %535 = vadd.xlane.f32.xlu0 %v517
        %v536 = vpop.xlane.xlu0 %535
        %537 = vadd.xlane.f32.xlu0 %v518
        %v538 = vpop.xlane.xlu0 %537
        %539 = vadd.xlane.f32.xlu0 %v519
        %v540 = vpop.xlane.xlu0 %539
        %541 = vadd.xlane.f32.xlu0 %v520
        %v542 = vpop.xlane.xlu0 %541
        %543 = vadd.xlane.f32.xlu0 %v521
        %v544 = vpop.xlane.xlu0 %543
        %545 = vadd.xlane.f32.xlu0 %v522
        %v546 = vpop.xlane.xlu0 %545
        %547 = vadd.xlane.f32.xlu0 %v523
        %v548 = vpop.xlane.xlu0 %547
        %549 = vadd.xlane.f32.xlu0 %v524
        %v550 = vpop.xlane.xlu0 %549
        %551 = vadd.xlane.f32.xlu0 %v525
        %v552 = vpop.xlane.xlu0 %551
        %553 = vadd.xlane.f32.xlu0 %v526
        %v554 = vpop.xlane.xlu0 %553
        %555 = vadd.xlane.f32.xlu0 %v527
        %v556 = vpop.xlane.xlu0 %555
        %557 = vadd.xlane.f32.xlu0 %v528
        %v558 = vpop.xlane.xlu0 %557
        %559 = vadd.xlane.f32.xlu0 %v529
        %v560 = vpop.xlane.xlu0 %559
        %561 = vadd.xlane.f32.xlu0 %v530
        %v562 = vpop.xlane.xlu0 %561
        %v563 = vmul.f32 %v532, 0.0078125
        %v564 = vmul.f32 %v534, 0.0078125
        %v565 = vmul.f32 %v536, 0.0078125
        %v566 = vmul.f32 %v538, 0.0078125
        %v567 = vmul.f32 %v540, 0.0078125
        %v568 = vmul.f32 %v542, 0.0078125
        %v569 = vmul.f32 %v544, 0.0078125
        %v570 = vmul.f32 %v546, 0.0078125
        %v571 = vmul.f32 %v548, 0.0078125
        %v572 = vmul.f32 %v550, 0.0078125
        %v573 = vmul.f32 %v552, 0.0078125
        %v574 = vmul.f32 %v554, 0.0078125
        %v575 = vmul.f32 %v556, 0.0078125
        %v576 = vmul.f32 %v558, 0.0078125
        %v577 = vmul.f32 %v560, 0.0078125
        %v578 = vmul.f32 %v562, 0.0078125
        %v579 = vmul.f32 %v499, %v499
        %v580 = vmul.f32 %v500, %v500
        %v581 = vmul.f32 %v501, %v501
        %v582 = vmul.f32 %v502, %v502
        %v583 = vmul.f32 %v503, %v503
        %v584 = vmul.f32 %v504, %v504
        %v585 = vmul.f32 %v505, %v505
        %v586 = vmul.f32 %v506, %v506
        %v587 = vmul.f32 %v507, %v507
        %v588 = vmul.f32 %v508, %v508
        %v589 = vmul.f32 %v509, %v509
        %v590 = vmul.f32 %v510, %v510
        %v591 = vmul.f32 %v511, %v511
        %v592 = vmul.f32 %v512, %v512
        %v593 = vmul.f32 %v513, %v513
        %v594 = vmul.f32 %v514, %v514
        %v595 = vsub.f32 %v563, %v579
        %v596 = vsub.f32 %v564, %v580
        %v597 = vsub.f32 %v565, %v581
        %v598 = vsub.f32 %v566, %v582
        %v599 = vsub.f32 %v567, %v583
        %v600 = vsub.f32 %v568, %v584
        %v601 = vsub.f32 %v569, %v585
        %v602 = vsub.f32 %v570, %v586
        %v603 = vsub.f32 %v571, %v587
        %v604 = vsub.f32 %v572, %v588
        %v605 = vsub.f32 %v573, %v589
        %v606 = vsub.f32 %v574, %v590
        %v607 = vsub.f32 %v575, %v591
        %v608 = vsub.f32 %v576, %v592
        %v609 = vsub.f32 %v577, %v593
        %v610 = vsub.f32 %v578, %v594
        %v611 = vmax.f32 %v595, 0.0
        %v612 = vmax.f32 %v596, 0.0
        %v613 = vmax.f32 %v597, 0.0
        %v614 = vmax.f32 %v598, 0.0
        %v615 = vmax.f32 %v599, 0.0
        %v616 = vmax.f32 %v600, 0.0
        %v617 = vmax.f32 %v601, 0.0
        %v618 = vmax.f32 %v602, 0.0
        %v619 = vmax.f32 %v603, 0.0
        %v620 = vmax.f32 %v604, 0.0
        %v621 = vmax.f32 %v605, 0.0
        %v622 = vmax.f32 %v606, 0.0
        %v623 = vmax.f32 %v607, 0.0
        %v624 = vmax.f32 %v608, 0.0
        %v625 = vmax.f32 %v609, 0.0
        %v626 = vmax.f32 %v610, 0.0
        %v627 = vsub.f32 %v405, %v499
        %v628 = vsub.f32 %v408, %v500
        %v629 = vsub.f32 %v413, %v501
        %v630 = vsub.f32 %v416, %v502
        %v631 = vsub.f32 %v421, %v503
        %v632 = vsub.f32 %v424, %v504
        %v633 = vsub.f32 %v429, %v505
        %v634 = vsub.f32 %v432, %v506
        %v635 = vsub.f32 %v437, %v507
        %v636 = vsub.f32 %v440, %v508
        %v637 = vsub.f32 %v445, %v509
        %v638 = vsub.f32 %v448, %v510
        %v639 = vsub.f32 %v453, %v511
        %v640 = vsub.f32 %v456, %v512
        %v641 = vsub.f32 %v461, %v513
        %v642 = vsub.f32 %v464, %v514
        %v643 = vadd.f32 %v611, 1e-05
        %v644 = vadd.f32 %v612, 1e-05
        %v645 = vadd.f32 %v613, 1e-05
        %v646 = vadd.f32 %v614, 1e-05
        %v647 = vadd.f32 %v615, 1e-05
        %v648 = vadd.f32 %v616, 1e-05
        %v649 = vadd.f32 %v617, 1e-05
        %v650 = vadd.f32 %v618, 1e-05
        %v651 = vadd.f32 %v619, 1e-05
        %v652 = vadd.f32 %v620, 1e-05
        %v653 = vadd.f32 %v621, 1e-05
        %v654 = vadd.f32 %v622, 1e-05
        %v655 = vadd.f32 %v623, 1e-05
        %v656 = vadd.f32 %v624, 1e-05
        %v657 = vadd.f32 %v625, 1e-05
        %v658 = vadd.f32 %v626, 1e-05
        %v659 = vrsqrt.pop %v643
        %v660 = vrsqrt.pop %v644
        %v661 = vrsqrt.pop %v645
        %v662 = vrsqrt.pop %v646
        %v663 = vrsqrt.pop %v647
        %v664 = vrsqrt.pop %v648
        %v665 = vrsqrt.pop %v649
        %v666 = vrsqrt.pop %v650
        %v667 = vrsqrt.pop %v651
        %v668 = vrsqrt.pop %v652
        %v669 = vrsqrt.pop %v653
        %v670 = vrsqrt.pop %v654
        %v671 = vrsqrt.pop %v655
        %v672 = vrsqrt.pop %v656
        %v673 = vrsqrt.pop %v657
        %v674 = vrsqrt.pop %v658
        %v675 = vmul.f32 %v627, %v659
        %v676 = vmul.f32 %v628, %v660
        %v677 = vmul.f32 %v629, %v661
        %v678 = vmul.f32 %v630, %v662
        %v679 = vmul.f32 %v631, %v663
        %v680 = vmul.f32 %v632, %v664
        %v681 = vmul.f32 %v633, %v665
        %v682 = vmul.f32 %v634, %v666
        %v683 = vmul.f32 %v635, %v667
        %v684 = vmul.f32 %v636, %v668
        %v685 = vmul.f32 %v637, %v669
        %v686 = vmul.f32 %v638, %v670
        %v687 = vmul.f32 %v639, %v671
        %v688 = vmul.f32 %v640, %v672
        %v689 = vmul.f32 %v641, %v673
        %v690 = vmul.f32 %v642, %v674
        %691 = vst [vmem:[%s249] sm:$0xff] %v675
        %692 = vst [vmem:[%s249 + $0x8] sm:$0xff] %v676
        %693 = vst [vmem:[%s249 + $0x10] sm:$0xff] %v677
        %694 = vst [vmem:[%s249 + $0x18] sm:$0xff] %v678
        %695 = vst [vmem:[%s249 + $0x20] sm:$0xff] %v679
        %696 = vst [vmem:[%s249 + $0x28] sm:$0xff] %v680
        %697 = vst [vmem:[%s249 + $0x30] sm:$0xff] %v681
        %698 = vst [vmem:[%s249 + $0x38] sm:$0xff] %v682
        %699 = vst [vmem:[%s249 + $0x40] sm:$0xff] %v683
        %700 = vst [vmem:[%s249 + $0x48] sm:$0xff] %v684
        %701 = vst [vmem:[%s249 + $0x50] sm:$0xff] %v685
        %702 = vst [vmem:[%s249 + $0x58] sm:$0xff] %v686
        %703 = vst [vmem:[%s249 + $0x60] sm:$0xff] %v687
        %704 = vst [vmem:[%s249 + $0x68] sm:$0xff] %v688
        %705 = vst [vmem:[%s249 + $0x70] sm:$0xff] %v689
        %706 = vst [vmem:[%s249 + $0x78] sm:$0xff] %v690
        %v707 = vpack.c.bf16 %v676, %v675
        %v708 = vpack.c.bf16 %v678, %v677
        %v709 = vpack.c.bf16 %v680, %v679
        %v710 = vpack.c.bf16 %v682, %v681
        %v711 = vpack.c.bf16 %v684, %v683
        %v712 = vpack.c.bf16 %v686, %v685
        %v713 = vpack.c.bf16 %v688, %v687
        %v714 = vpack.c.bf16 %v690, %v689
        %v715 = vld [vmem:[%s3] sm:$0xf]
        %v716 = vld [vmem:[%s3 + $0x4] sm:$0xf]
        %v717 = vld [vmem:[%s3 + $0x8] sm:$0xf]
        %v718 = vld [vmem:[%s3 + $0xc] sm:$0xf]
        %v719 = vld [vmem:[%s3 + $0x10] sm:$0xf]
        %v720 = vld [vmem:[%s3 + $0x14] sm:$0xf]
        %v721 = vld [vmem:[%s3 + $0x18] sm:$0xf]
        %v722 = vld [vmem:[%s3 + $0x1c] sm:$0xf]
        %v723 = vld [vmem:[%s3 + $0x20] sm:$0xf]
        %v724 = vld [vmem:[%s3 + $0x24] sm:$0xf]
        %v725 = vld [vmem:[%s3 + $0x28] sm:$0xf]
        %v726 = vld [vmem:[%s3 + $0x2c] sm:$0xf]
        %v727 = vld [vmem:[%s3 + $0x30] sm:$0xf]
        %v728 = vld [vmem:[%s3 + $0x34] sm:$0xf]
        %v729 = vld [vmem:[%s3 + $0x38] sm:$0xf]
        %v730 = vld [vmem:[%s3 + $0x3c] sm:$0xf]
        %v731 = vld [vmem:[%s4] sm:$0x1]
        %v733 = vlaneseq
        %v734 = vshrl.u32 %v733, 7
        %v735 = vsub.s32 0, %v734
        %v736 = vrot.slane %v731, %v735
        %v754 = vunpack.c.l.b16 %v715
        %v755 = vunpack.c.l.b16 %v716
        %v756 = vunpack.c.l.b16 %v717
        %v757 = vunpack.c.l.b16 %v718
        %v758 = vunpack.c.l.b16 %v719
        %v759 = vunpack.c.l.b16 %v720
        %v760 = vunpack.c.l.b16 %v721
        %v761 = vunpack.c.l.b16 %v722
        %v762 = vunpack.c.l.b16 %v723
        %v763 = vunpack.c.l.b16 %v724
        %v764 = vunpack.c.l.b16 %v725
        %v765 = vunpack.c.l.b16 %v726
        %v766 = vunpack.c.l.b16 %v727
        %v767 = vunpack.c.l.b16 %v728
        %v768 = vunpack.c.l.b16 %v729
        %v769 = vunpack.c.l.b16 %v730
        %v770 = vpack.c.b16 %v755, %v754
        %v771 = vpack.c.b16 %v757, %v756
        %v772 = vpack.c.b16 %v759, %v758
        %v773 = vpack.c.b16 %v761, %v760
        %v774 = vpack.c.b16 %v763, %v762
        %v775 = vpack.c.b16 %v765, %v764
        %v776 = vpack.c.b16 %v767, %v766
        %v777 = vpack.c.b16 %v769, %v768
        %786 = vmatprep.subr.bf16.mxu0 0
        %787 = vmatpush1.bf16.msra.mxu0 %v770
        %788 = vmatprep.subr.bf16.mxu0 0
        %789 = vmatpush1.bf16.msra.mxu0 %v771
        %790 = vmatprep.subr.bf16.mxu0 0
        %791 = vmatpush1.bf16.msra.mxu0 %v772
        %792 = vmatprep.subr.bf16.mxu0 0
        %793 = vmatpush1.bf16.msra.mxu0 %v773
        %794 = vmatprep.subr.bf16.mxu0 0
        %795 = vmatpush1.bf16.msra.mxu0 %v774
        %796 = vmatprep.subr.bf16.mxu0 0
        %797 = vmatpush1.bf16.msra.mxu0 %v775
        %798 = vmatprep.subr.bf16.mxu0 0
        %799 = vmatpush1.bf16.msra.mxu0 %v776
        %800 = vmatprep.subr.bf16.mxu0 0
        %801 = vmatpush1.bf16.msra.mxu0 %v777
        %802 = vmatprep.subr.bf16.mxu0 0
        %803 = vmatpush1.bf16.msra.mxu0 0
        %804 = vmatprep.subr.bf16.mxu0 0
        %805 = vmatpush1.bf16.msra.mxu0 0
        %806 = vmatprep.subr.bf16.mxu0 0
        %807 = vmatpush1.bf16.msra.mxu0 0
        %808 = vmatprep.subr.bf16.mxu0 0
        %809 = vmatpush1.bf16.msra.mxu0 0
        %810 = vmatprep.subr.bf16.mxu0 0
        %811 = vmatpush1.bf16.msra.mxu0 0
        %812 = vmatprep.subr.bf16.mxu0 0
        %813 = vmatpush1.bf16.msra.mxu0 0
        %814 = vmatprep.subr.bf16.mxu0 0
        %815 = vmatpush1.bf16.msra.mxu0 0
        %816 = vmatprep.subr.bf16.mxu0 0
        %817 = vmatpush1.bf16.msra.mxu0 0
        %818 = vmatprep.mubr.bf16.mxu0 0
        %819 = vmatmul.mubr.bf16.gmra.mrb[0].mxu0 %v707
        %v820 = vpop.f32.mrb[0].mxu0
        %v821 = vadd.f32 %v736, %v820
        %v822 = vpop.f32.mrb[0].mxu0
        %v823 = vpop.f32.mrb[0].mxu0
        %v824 = vadd.f32 %v736, %v823
        %v825 = vpop.f32.mrb[0].mxu0
        %826 = vmatprep.mubr.bf16.mxu0 0
        %827 = vmatmul.mubr.bf16.gmra.mrb[0].mxu0 %v708
        %v828 = vpop.f32.mrb[0].mxu0
        %v829 = vadd.f32 %v736, %v828
        %v830 = vpop.f32.mrb[0].mxu0
        %v831 = vpop.f32.mrb[0].mxu0
        %v832 = vadd.f32 %v736, %v831
        %v833 = vpop.f32.mrb[0].mxu0
        %834 = vmatprep.mubr.bf16.mxu0 0
        %835 = vmatmul.mubr.bf16.gmra.mrb[0].mxu0 %v709
        %v836 = vpop.f32.mrb[0].mxu0
        %v837 = vadd.f32 %v736, %v836
        %v838 = vpop.f32.mrb[0].mxu0
        %v839 = vpop.f32.mrb[0].mxu0
        %v840 = vadd.f32 %v736, %v839
        %v841 = vpop.f32.mrb[0].mxu0
        %842 = vmatprep.mubr.bf16.mxu0 0
        %843 = vmatmul.mubr.bf16.gmra.mrb[0].mxu0 %v710
        %v844 = vpop.f32.mrb[0].mxu0
        %v845 = vadd.f32 %v736, %v844
        %v846 = vpop.f32.mrb[0].mxu0
        %v847 = vpop.f32.mrb[0].mxu0
        %v848 = vadd.f32 %v736, %v847
        %v849 = vpop.f32.mrb[0].mxu0
        %850 = vmatprep.mubr.bf16.mxu0 0
        %851 = vmatmul.mubr.bf16.gmra.mrb[0].mxu0 %v711
        %v852 = vpop.f32.mrb[0].mxu0
        %v853 = vadd.f32 %v736, %v852
        %v854 = vpop.f32.mrb[0].mxu0
        %v855 = vpop.f32.mrb[0].mxu0
        %v856 = vadd.f32 %v736, %v855
        %v857 = vpop.f32.mrb[0].mxu0
        %858 = vmatprep.mubr.bf16.mxu0 0
        %859 = vmatmul.mubr.bf16.gmra.mrb[0].mxu0 %v712
        %v860 = vpop.f32.mrb[0].mxu0
        %v861 = vadd.f32 %v736, %v860
        %v862 = vpop.f32.mrb[0].mxu0
        %v863 = vpop.f32.mrb[0].mxu0
        %v864 = vadd.f32 %v736, %v863
        %v865 = vpop.f32.mrb[0].mxu0
        %866 = vmatprep.mubr.bf16.mxu0 0
        %867 = vmatmul.mubr.bf16.gmra.mrb[0].mxu0 %v713
        %v868 = vpop.f32.mrb[0].mxu0
        %v869 = vadd.f32 %v736, %v868
        %v870 = vpop.f32.mrb[0].mxu0
        %v871 = vpop.f32.mrb[0].mxu0
        %v872 = vadd.f32 %v736, %v871
        %v873 = vpop.f32.mrb[0].mxu0
        %874 = vmatprep.mubr.bf16.mxu0 0
        %875 = vmatmul.mubr.bf16.gmra.mrb[0].mxu0 %v714
        %v876 = vpop.f32.mrb[0].mxu0
        %v877 = vadd.f32 %v736, %v876
        %v878 = vpop.f32.mrb[0].mxu0
        %v879 = vpop.f32.mrb[0].mxu0
        %v880 = vadd.f32 %v736, %v879
        %v881 = vpop.f32.mrb[0].mxu0
        %882 = vdwg.mxu0
        %883 = vst [vmem:[%s256] sm:$0xff] %v821
        %884 = vst [vmem:[%s256 + $0x8] sm:$0xff] %v824
        %885 = vst [vmem:[%s256 + $0x10] sm:$0xff] %v829
        %886 = vst [vmem:[%s256 + $0x18] sm:$0xff] %v832
        %887 = vst [vmem:[%s256 + $0x20] sm:$0xff] %v837
        %888 = vst [vmem:[%s256 + $0x28] sm:$0xff] %v840
        %889 = vst [vmem:[%s256 + $0x30] sm:$0xff] %v845
        %890 = vst [vmem:[%s256 + $0x38] sm:$0xff] %v848
        %891 = vst [vmem:[%s256 + $0x40] sm:$0xff] %v853
        %892 = vst [vmem:[%s256 + $0x48] sm:$0xff] %v856
        %893 = vst [vmem:[%s256 + $0x50] sm:$0xff] %v861
        %894 = vst [vmem:[%s256 + $0x58] sm:$0xff] %v864
        %895 = vst [vmem:[%s256 + $0x60] sm:$0xff] %v869
        %896 = vst [vmem:[%s256 + $0x68] sm:$0xff] %v872
        %897 = vst [vmem:[%s256 + $0x70] sm:$0xff] %v877
        %898 = vst [vmem:[%s256 + $0x78] sm:$0xff] %v880
        %s899 = sand.u32 %s142, 1
        %s900 = scalar_lea.sflag [#allocation3], %s899
        %s901 = sand.u32 %s142, 1
        %s902 = smul.addr %s901, 128
        %s903 = scalar_lea.vmem [#allocation2], %s902
        %s904 = sand.u32 %s168, 1
        %s905 = scalar_lea.sflag [#allocation5], %s904
        %s906 = sand.u32 %s168, 1
        %s907 = smul.addr %s906, 128
        %s908 = scalar_lea.vmem [#allocation4], %s907
        // Predicated region
        $region41: #{tpu_custom_call.1} parent=39 // pred_check
          %p909 = pneg %p152
        $region42: #{tpu_custom_call.1} parent=39 // pred_check_branch
          %911 = sbr.rel (%p909) target = $region44
        $region43: #{tpu_custom_call.1} parent=39 // pred_region
          %s912 = smul.u32 16, %s24
          %s914 = ssub.s32 2048, 2048
          %915 = vsyncadd %s900, %s914
          %s916 = smul.addr %s912, 128
          %s917 = scalar_lea.hbm %s5, %s916
          %s918 = sshll.u32 %s903, 4
          %s919 = int_to_ptr.vmem [resolvable:$true] %s918
          %924 = dma.vmem_to_hbm [thread:$0]  %s919, 2048, %s917, %s900, 128, 128, 8
        $region44: #{tpu_custom_call.1} parent=39 // pred_fallthru
          _
        // Predicated region
        $region45: #{tpu_custom_call.1} parent=39 // pred_check
          %p925 = pneg %p178
        $region46: #{tpu_custom_call.1} parent=39 // pred_check_branch
          %927 = sbr.rel (%p925) target = $region48
        $region47: #{tpu_custom_call.1} parent=39 // pred_region
          %s928 = smul.u32 16, %s24
          %s930 = ssub.s32 2048, 2048
          %931 = vsyncadd %s905, %s930
          %s932 = smul.addr %s928, 128
          %s933 = scalar_lea.hbm %s6, %s932
          %s934 = sshll.u32 %s908, 4
          %s935 = int_to_ptr.vmem [resolvable:$true] %s934
          %940 = dma.vmem_to_hbm [thread:$0]  %s935, 2048, %s933, %s905, 128, 128, 8
        $region48: #{tpu_custom_call.1} parent=39 // pred_fallthru
          _
      $region40: #{tpu_custom_call.1} parent=5 // pred_fallthru
        _
      %p941 = scmp.le.s32.totalorder 2, %s19
      // Predicated region
      $region49: #{tpu_custom_call.1} parent=5 // pred_check
        %p942 = pneg %p941
      $region50: #{tpu_custom_call.1} parent=5 // pred_check_branch
        %944 = sbr.rel (%p942) target = $region52
      $region51: #{tpu_custom_call.1} parent=5 // pred_region
        %s945 = ssub.s32 %s19, 2
        // Predicated region
        $region53: #{tpu_custom_call.1} parent=51 // pred_check
          %p946 = pneg %p158
        $region54: #{tpu_custom_call.1} parent=51 // pred_check_branch
          %948 = sbr.rel (%p946) target = $region56
        $region55: #{tpu_custom_call.1} parent=51 // pred_region
          %s949 = sand.u32 %s143, 1
          %s950 = scalar_lea.sflag [#allocation3], %s949
          %s951 = sand.u32 %s143, 1
          %s952 = smul.addr %s951, 128
          %s953 = scalar_lea.vmem [#allocation2], %s952
          %954 = dma.done %s950, 2048
        $region56: #{tpu_custom_call.1} parent=51 // pred_fallthru
          _
        // Predicated region
        $region57: #{tpu_custom_call.1} parent=51 // pred_check
          %p955 = pneg %p184
        $region58: #{tpu_custom_call.1} parent=51 // pred_check_branch
          %957 = sbr.rel (%p955) target = $region60
        $region59: #{tpu_custom_call.1} parent=51 // pred_region
          %s958 = sand.u32 %s169, 1
          %s959 = scalar_lea.sflag [#allocation5], %s958
          %s960 = sand.u32 %s169, 1
          %s961 = smul.addr %s960, 128
          %s962 = scalar_lea.vmem [#allocation4], %s961
          %963 = dma.done %s959, 2048
        $region60: #{tpu_custom_call.1} parent=51 // pred_fallthru
          _
      $region52: #{tpu_custom_call.1} parent=5 // pred_fallthru
        _
    $region6: #{tpu_custom_call.1} parent=1 // loop_footer
      %s23 = sadd.s32 1, %s19
    $region7: #{tpu_custom_call.1} parent=1 // loop_footer_branch
      %18 = sbr.rel target = $region3
    $region8: #{tpu_custom_call.1} parent=1 // loop_exit
      _
    %964 = vsyncpa [#allocation3], 1
    %s965 = scalar_lea.sflag [#allocation3], 1
    %966 = vsyncpa %s965, 1
    %967 = vsyncpa [#allocation5], 1
    %s968 = scalar_lea.sflag [#allocation5], 1
    %969 = vsyncpa %s968, 1

</llo_original>
